<compile_context>
chip_gen: v5e
topology: v5e:2x2
jax: 0.10.0
libtpu: 0.0.40
codegen_flags: <defaults>
</compile_context>

<pallas_src>
import math

import jax
import jax.numpy as jnp
from jax.experimental import pallas as pl
from jax.experimental.pallas import tpu as pltpu

_LANES = 128
_BLOCK_TARGET_BYTES = 2 * 1024 * 1024   # ~2 MiB per block; 4x buffered => ~8 MiB VMEM


def _drop_path_kernel(scale_ref, x_ref, o_ref):
    """One (TN, TR, C) activation block times a (TN, 1, 1) per-sample scale block."""
    o_ref[...] = x_ref[...] * scale_ref[...]


def drop_path(x, drop_prob: float = 0.0, training: bool = False, *, key=None):
    """Pallas implementation of drop_path_f / DropPath.forward (per-sample stochastic depth)."""
    if drop_prob == 0.0 or not training:
        return x                                        # identity path (module semantics)
    assert key is not None, "need a PRNG key when training with drop_prob > 0"

    keep_prob = 1.0 - drop_prob
    N = x.shape[0]

    # Per-sample mask, matching: random_tensor = floor(keep_prob + U[0,1)); out = x/keep_prob * mask
    u = jax.random.uniform(key, (N,), dtype=jnp.float32)
    mask = jnp.floor(keep_prob + u)                     # 0.0 or 1.0 per sample
    scale = (mask / keep_prob).astype(x.dtype)          # 0 or 1/keep_prob, in x's dtype
    scale = scale.reshape(N, 1, 1)                      # blocked VMEM input, broadcast in-kernel

    feat = math.prod(x.shape[1:])
    itemsize = jnp.dtype(x.dtype).itemsize
    sub_mult = 8 * max(1, 4 // itemsize)                # sublane packing: 8 f32 / 16 bf16 / 32 int8

    # Lane-dense per-sample view; no padding, no post-slice.
    if feat % _LANES == 0:
        R, C = feat // _LANES, _LANES
    else:
        # TODO(synk): ragged feat keeps one (1, feat) row per sample (correct, but a
        #             single sublane per sample -> not sublane-dense).
        R, C = 1, feat
    xf = x.reshape(N, R, C)

    bytes_per_sample = feat * itemsize
    if bytes_per_sample <= _BLOCK_TARGET_BYTES:
        # Pack whole samples into a block up to the budget, but keep >= 2 sample-steps
        # when N >= 2 so v7x's two TensorCores both get work.
        TR = R
        TN = max(1, _BLOCK_TARGET_BYTES // bytes_per_sample)
        if N >= 2:
            TN = min(TN, pl.cdiv(N, 2))
        TN = min(TN, N)
    else:
        # One sample split over feature rows; row tile aligned to the sublane packing.
        TN = 1
        rows_budget = max(1, _BLOCK_TARGET_BYTES // (C * itemsize))
        TR = max(sub_mult, (rows_budget // sub_mult) * sub_mult)
        TR = min(TR, R)

    grid = (pl.cdiv(N, TN), pl.cdiv(R, TR))

    out = pl.pallas_call(
        _drop_path_kernel,
        out_shape=jax.ShapeDtypeStruct((N, R, C), x.dtype),
        grid_spec=pltpu.PrefetchScalarGridSpec(
            num_scalar_prefetch=0,
            grid=grid,
            in_specs=[
                pl.BlockSpec((TN, 1, 1), lambda i, j: (i, 0, 0)),    # per-sample scale
                pl.BlockSpec((TN, TR, C), lambda i, j: (i, j, 0)),   # activations
            ],
            out_specs=pl.BlockSpec((TN, TR, C), lambda i, j: (i, j, 0)),
        ),
        compiler_params=pltpu.CompilerParams(
            dimension_semantics=("parallel", "parallel"),   # pure elementwise; shardable
            vmem_limit_bytes=32 * 1024 * 1024,              # explicit cap, safe on v5e/v6e/v7x
        ),
    )(scale, xf)

    return out.reshape(x.shape)


if __name__ == "__main__":
    # DropPath(drop_prob=0.2) in training mode, small synthetic shapes.
    N, C, H, W = 2, 4, 16, 16
    drop_prob = 0.2
    keep_prob = 1.0 - drop_prob

    key = jax.random.PRNGKey(0)
    kx, kmask = jax.random.split(key, 2)

    x = jax.random.normal(kx, (N, C, H, W), jnp.float32)

    # Training path (kernel).
    out = drop_path(x, drop_prob, training=True, key=kmask)
    out = jax.block_until_ready(out)

    # Pure-JAX reference (same per-sample mask draw, same keep_prob scaling).
    u = jax.random.uniform(kmask, (N,), dtype=jnp.float32)
    mask = jnp.floor(keep_prob + u)
    ref = x / keep_prob * mask.reshape(N, 1, 1, 1)

    assert out.shape == x.shape
    assert jnp.allclose(out, ref, atol=1e-6, rtol=1e-6), "mismatch vs reference (training path)"

    # Ragged feature count (feat % 128 != 0) — exercises the no-pad fallback layout.
    x_ragged = jax.random.normal(kx, (N, 3, 5, 5), jnp.float32)
    out_ragged = jax.block_until_ready(drop_path(x_ragged, drop_prob, training=True, key=kmask))
    ref_ragged = x_ragged / keep_prob * mask.reshape(N, 1, 1, 1)
    assert jnp.allclose(out_ragged, ref_ragged, atol=1e-6, rtol=1e-6), "mismatch (ragged path)"

    # Eval / drop_prob=0 paths must be the identity.
    out_eval = drop_path(x, drop_prob, training=False)
    assert jnp.array_equal(out_eval, x), "eval path must be identity"
    out_zero = drop_path(x, 0.0, training=True, key=kmask)
    assert jnp.array_equal(out_zero, x), "drop_prob=0 path must be identity"

    print("KERNEL_OK")
</pallas_src>

<mosaic_0001>
module attributes {stable_mosaic.version = 11 : i64} {
  func.func @_drop_path_kernel(%arg0: i32, %arg1: i32, %arg2: memref<1x1x1xf32, #tpu.memory_space<vmem>>, %arg3: memref<1x8x128xf32, #tpu.memory_space<vmem>>, %arg4: memref<1x8x128xf32, #tpu.memory_space<vmem>>) attributes {dimension_semantics = [#tpu.dimension_semantics<parallel>, #tpu.dimension_semantics<parallel>], iteration_bounds = array<i64: 2, 1>, scalar_prefetch = 0 : i64, scratch_operands = 0 : i64, tpu.core_type = #tpu.core_type<tc>, window_params = [{transform_indices = @transform_0, window_bounds = array<i64: 1, 1, 1>}, {transform_indices = @transform_1, window_bounds = array<i64: 1, 8, 128>}, {transform_indices = @transform_2, window_bounds = array<i64: 1, 8, 128>}]} {
    %c0 = arith.constant 0 : index
    %c0_0 = arith.constant 0 : index
    %c0_1 = arith.constant 0 : index
    %0 = vector.load %arg3[%c0, %c0_0, %c0_1] : memref<1x8x128xf32, #tpu.memory_space<vmem>>, vector<1x8x128xf32>
    %c0_2 = arith.constant 0 : index
    %c0_3 = arith.constant 0 : index
    %c0_4 = arith.constant 0 : index
    %1 = vector.load %arg2[%c0_2, %c0_3, %c0_4] : memref<1x1x1xf32, #tpu.memory_space<vmem>>, vector<1x1x1xf32>
    %2 = vector.broadcast %1 : vector<1x1x1xf32> to vector<1x8x128xf32>
    %3 = arith.mulf %0, %2 : vector<1x8x128xf32>
    %c0_5 = arith.constant 0 : index
    %c0_6 = arith.constant 0 : index
    %c0_7 = arith.constant 0 : index
    %4 = vector.load %arg4[%c0_5, %c0_6, %c0_7] : memref<1x8x128xf32, #tpu.memory_space<vmem>>, vector<1x8x128xf32>
    tpu.vector_store %arg4[%c0_5, %c0_6, %c0_7], %3 {strides = array<i32>} : memref<1x8x128xf32, #tpu.memory_space<vmem>>, vector<1x8x128xf32>,
    return
  }
  func.func @transform_0(%arg0: i32, %arg1: i32) -> (i32, i32, i32) {
    %c0_i32 = arith.constant 0 : i32
    %c0_i32_0 = arith.constant 0 : i32
    %c0_i32_1 = arith.constant 0 : i32
    return %arg0, %c0_i32, %c0_i32_0 : i32, i32, i32
  }
  func.func @transform_1(%arg0: i32, %arg1: i32) -> (i32, i32, i32) {
    %c0_i32 = arith.constant 0 : i32
    %c0_i32_0 = arith.constant 0 : i32
    return %arg0, %arg1, %c0_i32 : i32, i32, i32
  }
  func.func @transform_2(%arg0: i32, %arg1: i32) -> (i32, i32, i32) {
    %c0_i32 = arith.constant 0 : i32
    %c0_i32_0 = arith.constant 0 : i32
    return %arg0, %arg1, %c0_i32 : i32, i32, i32
  }
}

</mosaic_0001>

<llo_original>
// kernel: tpu_custom_call.1
$region0: #{tpu_custom_call.1}
  #allocation0 [shape = 'u32[]', space=smem, size = 0x4, offset = 0x4, fixed_abs, tag = 'smem constant byte address 0x4 - core index']
  #allocation1 [shape = 'u32[72,128]{1,0:T(1,128)}', space=vmem, size = 0x9000, scoped, tag = 'internal scratch']
  %s0 = inlined_call_operand.vmem [shape: f32[2,1,1], index: 0, kind: input, shape index: {}]
  %s1 = inlined_call_operand.hbm [shape: f32[2,8,128], index: 1, kind: input, shape index: {}]
  %s2 = inlined_call_operand.hbm [shape: f32[2,8,128], index: 2, kind: output, shape index: {}]
  %s3 = sld [smem:[#allocation0]]
  $region45: #{tpu_custom_call.1} parent=0
    _
  %s5 = ssub.s32 1, %s3
  %s6 = scalar_select 0, %s5, %s3
  $region1: #{tpu_custom_call.1} parent=0
    #allocation2 [shape = 'u8[8192]{0}', space=vmem, size = 0x2000, scoped, tag = 'input window, operand 1']
    #allocation3 [shape = 's32[2]{0}', space=sflag, size = 0x8, scoped, tag = 'scoped memory for tpu_custom_call.1']
    #allocation4 [shape = 's32[2]{0}', space=sflag, size = 0x8, scoped, tag = 'scoped memory for tpu_custom_call.1']
    #allocation5 [shape = 'u8[8192]{0}', space=vmem, size = 0x2000, scoped, tag = 'output window, operand 0']
    %7 = vsyncpa [#allocation3], 0
    %s8 = scalar_lea.sflag [#allocation3], 1
    %9 = vsyncpa %s8, 0
    %10 = vsyncpa [#allocation4], 0
    %s11 = scalar_lea.sflag [#allocation4], 1
    %12 = vsyncpa %s11, 0
    loop: start=0, step=1, limit=4
    $region2: #{tpu_custom_call.1} parent=1 // loop_pre_header
      _
    $region3: #{tpu_custom_call.1} parent=1 // loop_header
      %s14 = sphi 0, %s18
      %p15 = scmp.ge.s32.totalorder %s14, 4
      %s21 = sphi 0, %s33
      %s22 = sphi 0, %s29
      %s23 = sphi 0, %s21
      %s24 = sphi 0, %s22
      %s25 = sphi 0, %s23
      %s26 = sphi 0, %s24
      %s36 = sphi 0, %s38
      %s39 = sphi 0, %s36
      %s40 = sphi 0, %s39
      %s56 = sphi 0, %s40
      %s64 = sphi 0, %s66
      %s67 = sphi 0, %s64
      %s68 = sphi 0, %s67
      %s84 = sphi 0, %s68
      %s92 = sphi 0, %s94
      %s95 = sphi 0, %s92
      %s96 = sphi 0, %s95
      %s112 = sphi 0, %s96
    $region4: #{tpu_custom_call.1} parent=1 // loop_header_branch
      %17 = sbr.rel (%p15) target = $region8
    $region5: #{tpu_custom_call.1} parent=1 // loop_body
      %s19 = ssub.s32 %s14, 1
      %s20 = ssub.s32 %s14, 2
      %s27 = sadd.s32 1, %s22
      %p28 = scmp.ge.s32.totalorder %s27, 1
      %s29 = scalar_select %p28, 0, %s27
      %s30 = sadd.s32 1, %s21
      %s31 = scalar_select %p28, %s30, %s21
      %p32 = scmp.ge.s32.totalorder %s31, 2
      %s33 = scalar_select %p32, 0, %s31
      %s34 = ssub.s32 %s21, %s33
      %p35 = scmp.eq.s32.totalorder %s34, 0
      %s37 = sadd.s32 %s36, 1
      %s38 = scalar_select %p35, %s36, %s37
      %p41 = pneg %p35
      %p42 = scmp.eq.s32.totalorder %s14, 1
      %p43 = por %p41, %p42
      %p44 = scmp.ne.s32.totalorder %s36, %s39
      %p45 = scmp.eq.s32.totalorder %s14, 0
      %p46 = por %p44, %p45
      %p47 = scmp.ne.s32.totalorder %s36, %s39
      %p48 = scmp.eq.s32.totalorder %s19, 1
      %p49 = por %p47, %p48
      %p50 = scmp.ne.s32.totalorder %s39, %s40
      %p51 = scmp.eq.s32.totalorder %s19, 0
      %p52 = por %p50, %p51
      %p53 = scmp.ne.s32.totalorder %s39, %s40
      %p54 = scmp.eq.s32.totalorder %s20, 1
      %p55 = por %p53, %p54
      %p57 = scmp.ne.s32.totalorder %s40, %s56
      %p58 = scmp.eq.s32.totalorder %s20, 0
      %p59 = por %p57, %p58
      %s60 = ssub.s32 %s21, %s33
      %s61 = ssub.s32 %s22, %s29
      %s62 = sor.u32 %s60, %s61
      %p63 = scmp.eq.s32.totalorder %s62, 0
      %s65 = sadd.s32 %s64, 1
      %s66 = scalar_select %p63, %s64, %s65
      %p69 = pneg %p63
      %p70 = scmp.eq.s32.totalorder %s14, 1
      %p71 = por %p69, %p70
      %p72 = scmp.ne.s32.totalorder %s64, %s67
      %p73 = scmp.eq.s32.totalorder %s14, 0
      %p74 = por %p72, %p73
      %p75 = scmp.ne.s32.totalorder %s64, %s67
      %p76 = scmp.eq.s32.totalorder %s19, 1
      %p77 = por %p75, %p76
      %p78 = scmp.ne.s32.totalorder %s67, %s68
      %p79 = scmp.eq.s32.totalorder %s19, 0
      %p80 = por %p78, %p79
      %p81 = scmp.ne.s32.totalorder %s67, %s68
      %p82 = scmp.eq.s32.totalorder %s20, 1
      %p83 = por %p81, %p82
      %p85 = scmp.ne.s32.totalorder %s68, %s84
      %p86 = scmp.eq.s32.totalorder %s20, 0
      %p87 = por %p85, %p86
      %s88 = ssub.s32 %s21, %s33
      %s89 = ssub.s32 %s22, %s29
      %s90 = sor.u32 %s88, %s89
      %p91 = scmp.eq.s32.totalorder %s90, 0
      %s93 = sadd.s32 %s92, 1
      %s94 = scalar_select %p91, %s92, %s93
      %p97 = pneg %p91
      %p98 = scmp.eq.s32.totalorder %s14, 1
      %p99 = por %p97, %p98
      %p100 = scmp.ne.s32.totalorder %s92, %s95
      %p101 = scmp.eq.s32.totalorder %s14, 0
      %p102 = por %p100, %p101
      %p103 = scmp.ne.s32.totalorder %s92, %s95
      %p104 = scmp.eq.s32.totalorder %s19, 1
      %p105 = por %p103, %p104
      %p106 = scmp.ne.s32.totalorder %s95, %s96
      %p107 = scmp.eq.s32.totalorder %s19, 0
      %p108 = por %p106, %p107
      %p109 = scmp.ne.s32.totalorder %s95, %s96
      %p110 = scmp.eq.s32.totalorder %s20, 1
      %p111 = por %p109, %p110
      %p113 = scmp.ne.s32.totalorder %s96, %s112
      %p114 = scmp.eq.s32.totalorder %s20, 0
      %p115 = por %p113, %p114
      %p116 = scmp.le.s32.totalorder 1, %s14
      %p117 = scmp.lt.s32.totalorder %s14, 3
      %p118 = pnand %p116, %p117
      %p119 = pneg %p118
      // Predicated region
      $region9: #{tpu_custom_call.1} parent=5 // pred_check
        _
      $region10: #{tpu_custom_call.1} parent=5 // pred_check_branch
        %121 = sbr.rel (%p118) target = $region12
      $region11: #{tpu_custom_call.1} parent=5 // pred_region
        %s122 = ssub.s32 %s14, 1
      $region12: #{tpu_custom_call.1} parent=5 // pred_fallthru
        _
      %p123 = scmp.lt.s32.totalorder %s14, 2
      // Predicated region
      $region13: #{tpu_custom_call.1} parent=5 // pred_check
        %p124 = pneg %p123
      $region14: #{tpu_custom_call.1} parent=5 // pred_check_branch
        %126 = sbr.rel (%p124) target = $region16
      $region15: #{tpu_custom_call.1} parent=5 // pred_region
        // Predicated region
        $region17: #{tpu_custom_call.1} parent=15 // pred_check
          %p127 = pneg %p46
        $region18: #{tpu_custom_call.1} parent=15 // pred_check_branch
          %129 = sbr.rel (%p127) target = $region20
        $region19: #{tpu_custom_call.1} parent=15 // pred_region
          %p130 = scmp.lt.s32.totalorder %s21, 1
          %s131 = scalar_select %p130, %s21, 1
          %s132 = scalar_lea.vmem %s0, %s131
        $region20: #{tpu_custom_call.1} parent=15 // pred_fallthru
          _
        // Predicated region
        $region21: #{tpu_custom_call.1} parent=15 // pred_check
          %p133 = pneg %p74
        $region22: #{tpu_custom_call.1} parent=15 // pred_check_branch
          %135 = sbr.rel (%p133) target = $region24
        $region23: #{tpu_custom_call.1} parent=15 // pred_region
          %s136 = sand.u32 %s64, 1
          %s137 = scalar_lea.sflag [#allocation3], %s136
          %s138 = sand.u32 %s64, 1
          %s139 = smul.addr %s138, 8
          %s140 = scalar_lea.vmem [#allocation2], %s139
          %142 = vsyncadd %s137, 0
          %s143 = sadd.s32 %s22, %s21
          %s144 = smul.addr %s143, 8
          %s145 = scalar_lea.hbm %s1, %s144
          %s147 = sshll.u32 %s145, 4
          %s148 = int_to_ptr.hbm [resolvable:$true] %s147
          %s149 = sshll.u32 %s140, 4
          %s150 = int_to_ptr.vmem [resolvable:$true] %s149
          %152 = dma.hbm_to_vmem [thread:$0]  %s148, 128, %s150, %s137
        $region24: #{tpu_custom_call.1} parent=15 // pred_fallthru
          _
      $region16: #{tpu_custom_call.1} parent=5 // pred_fallthru
        _
      %p153 = scmp.le.s32.totalorder 1, %s14
      %p154 = scmp.lt.s32.totalorder %s14, 3
      %p155 = pnand %p153, %p154
      %p156 = pneg %p155
      // Predicated region
      $region25: #{tpu_custom_call.1} parent=5 // pred_check
        _
      $region26: #{tpu_custom_call.1} parent=5 // pred_check_branch
        %158 = sbr.rel (%p155) target = $region28
      $region27: #{tpu_custom_call.1} parent=5 // pred_region
        %s159 = ssub.s32 %s14, 1
        %s160 = sand.u32 %s67, 1
        %s161 = scalar_lea.sflag [#allocation3], %s160
        %s162 = sand.u32 %s67, 1
        %s163 = smul.addr %s162, 8
        %s164 = scalar_lea.vmem [#allocation2], %s163
        // Predicated region
        $region29: #{tpu_custom_call.1} parent=27 // pred_check
          %p165 = pneg %p80
        $region30: #{tpu_custom_call.1} parent=27 // pred_check_branch
          %167 = sbr.rel (%p165) target = $region32
        $region31: #{tpu_custom_call.1} parent=27 // pred_region
          %169 = dma.done %s161, 128
        $region32: #{tpu_custom_call.1} parent=27 // pred_fallthru
          _
        %p170 = scmp.lt.s32.totalorder %s23, 1
        %s171 = scalar_select %p170, %s23, 1
        %s172 = scalar_lea.vmem %s0, %s171
        %p173 = pneg %p52
        %p174 = pneg %p49
        %s175 = sand.u32 %s67, 1
        %s176 = scalar_lea.sflag [#allocation3], %s175
        %s177 = sand.u32 %s67, 1
        %s178 = smul.addr %s177, 8
        %s179 = scalar_lea.vmem [#allocation2], %s178
        %p180 = pneg %p80
        %p181 = pneg %p77
        %p182 = pneg %p108
        %p183 = pneg %p105
        %s184 = sand.u32 %s95, 1
        %s185 = scalar_lea.sflag [#allocation4], %s184
        %s186 = sand.u32 %s95, 1
        %s187 = smul.addr %s186, 8
        %s188 = scalar_lea.vmem [#allocation5], %s187
        %p189 = scmp.lt.s32.totalorder %s23, 1
        %s190 = scalar_select %p189, %s23, 1
        %s191 = scalar_lea.vmem %s0, %s190
        %v192 = vld [vmem:[%s164] sm:$0xff]
        %v193 = vld [vmem:[%s191] sm:$0x1]
        %v195 = vperm.slane %v193, 0
        %196 = vset.pattern.permute.xlu0 0
        %197 = vperm.xlu0 %196, %v195
        %v198 = vpop.permute.xlu0 %197
        %v200 = vmul.f32 %v192, %v198
        %201 = vst [vmem:[%s188] sm:$0xff] %v200
        %s202 = sand.u32 %s95, 1
        %s203 = scalar_lea.sflag [#allocation4], %s202
        %s204 = sand.u32 %s95, 1
        %s205 = smul.addr %s204, 8
        %s206 = scalar_lea.vmem [#allocation5], %s205
        // Predicated region
        $region33: #{tpu_custom_call.1} parent=27 // pred_check
          %p207 = pneg %p105
        $region34: #{tpu_custom_call.1} parent=27 // pred_check_branch
          %209 = sbr.rel (%p207) target = $region36
        $region35: #{tpu_custom_call.1} parent=27 // pred_region
          %211 = vsyncadd %s203, 0
          %s212 = sadd.s32 %s24, %s23
          %s213 = smul.addr %s212, 8
          %s214 = scalar_lea.hbm %s2, %s213
          %s216 = sshll.u32 %s206, 4
          %s217 = int_to_ptr.vmem [resolvable:$true] %s216
          %s218 = sshll.u32 %s214, 4
          %s219 = int_to_ptr.hbm [resolvable:$true] %s218
          %221 = dma.vmem_to_hbm [thread:$0]  %s217, 128, %s219, %s203
        $region36: #{tpu_custom_call.1} parent=27 // pred_fallthru
          _
      $region28: #{tpu_custom_call.1} parent=5 // pred_fallthru
        _
      %p222 = scmp.le.s32.totalorder 2, %s14
      // Predicated region
      $region37: #{tpu_custom_call.1} parent=5 // pred_check
        %p223 = pneg %p222
      $region38: #{tpu_custom_call.1} parent=5 // pred_check_branch
        %225 = sbr.rel (%p223) target = $region40
      $region39: #{tpu_custom_call.1} parent=5 // pred_region
        %s226 = ssub.s32 %s14, 2
        // Predicated region
        $region41: #{tpu_custom_call.1} parent=39 // pred_check
          %p227 = pneg %p111
        $region42: #{tpu_custom_call.1} parent=39 // pred_check_branch
          %229 = sbr.rel (%p227) target = $region44
        $region43: #{tpu_custom_call.1} parent=39 // pred_region
          %s230 = sand.u32 %s96, 1
          %s231 = scalar_lea.sflag [#allocation4], %s230
          %s232 = sand.u32 %s96, 1
          %s233 = smul.addr %s232, 8
          %s234 = scalar_lea.vmem [#allocation5], %s233
          %236 = dma.done %s231, 128
        $region44: #{tpu_custom_call.1} parent=39 // pred_fallthru
          _
      $region40: #{tpu_custom_call.1} parent=5 // pred_fallthru
        _
    $region6: #{tpu_custom_call.1} parent=1 // loop_footer
      %s18 = sadd.s32 1, %s14
    $region7: #{tpu_custom_call.1} parent=1 // loop_footer_branch
      %13 = sbr.rel target = $region3
    $region8: #{tpu_custom_call.1} parent=1 // loop_exit
      _
    %237 = vsyncpa [#allocation3], 1
    %s238 = scalar_lea.sflag [#allocation3], 1
    %239 = vsyncpa %s238, 1
    %240 = vsyncpa [#allocation4], 1
    %s241 = scalar_lea.sflag [#allocation4], 1
    %242 = vsyncpa %s241, 1

</llo_original>
